<compile_context>
chip_gen: v7x
topology: tpu7x:2x2x1
jax: 0.10.0
libtpu: 0.0.40
codegen_flags: <defaults>
</compile_context>

<pallas_src>
import functools
import numpy as np
import jax
import jax.numpy as jnp
from jax.experimental import pallas as pl
from jax.experimental.pallas import tpu as pltpu

EMBED_SIZE = 32
LAYER_NUM = 3

# Row-tile bounds for the packed (n_rows, P*E) layout.
#   MIN_TILE_ROWS=16 keeps blocks on the native bf16 (16,128) tile grid.
#   MAX_TILE_ROWS=2048 -> 8192-16384 tokens per step; per-step HBM traffic 2-4 MiB,
#   amortizing the ~0.35 us/step overhead while staying well inside the 32 MiB VMEM
#   budget derived above.
MIN_TILE_ROWS = 16
MAX_TILE_ROWS = 2048


def _round_up(x, m):
    return ((x + m - 1) // m) * m


def _default_pack():
    """4 tokens/row fills v5e's 128-wide MXU contraction; v6e/v7x MXUs are 256 wide,
    so 8 tokens/row halves the push count there."""
    try:
        kind = jax.devices()[0].device_kind.lower()
    except Exception:
        return 4
    if any(tag in kind for tag in ("v6", "v7", "7x")):
        return 8
    return 4


# ----------------------------- in-kernel math ------------------------------ #
def _erf_approx(z):
    # Abramowitz & Stegun 7.1.26, |err| <= 1.5e-7 (below bf16 input noise).
    a1 = jnp.float32(0.254829592)
    a2 = jnp.float32(-0.284496736)
    a3 = jnp.float32(1.421413741)
    a4 = jnp.float32(-1.453152027)
    a5 = jnp.float32(1.061405429)
    p = jnp.float32(0.3275911)
    sign = jnp.where(z >= 0, jnp.float32(1.0), jnp.float32(-1.0))
    az = jnp.abs(z)
    # Exact divide (EUP) — keeps GELU numerically faithful to torch.nn.GELU().
    t = jnp.float32(1.0) / (jnp.float32(1.0) + p * az)
    poly = ((((a5 * t + a4) * t + a3) * t + a2) * t + a1) * t
    return sign * (1.0 - poly * jnp.exp(-az * az))


def _gelu_exact(z):
    # nn.GELU() default = exact erf-based GELU.
    return 0.5 * z * (1.0 + _erf_approx(z * jnp.float32(0.7071067811865476)))


# --------------------------------- kernel ---------------------------------- #
def _scorenet_kernel(layer_num, embed_size,
                     te_ref, cond_ref,
                     wh_ref, bh_ref,
                     wff_ref, bff_ref,
                     wt_ref, bt_ref,
                     out_ref):
    """One grid step processes a (tile_rows, P*E) slab = tile_rows*P tokens.

    Streamed inputs are bf16; weights are resident bf16 (block-diagonal, so each
    packed row is P independent tokens); all VPU/EUP math and accumulation is f32.
    """
    inv_sqrt_e = jnp.float32(1.0 / np.sqrt(embed_size))

    te = te_ref[...].astype(jnp.float32) * inv_sqrt_e          # time_emb(x)/sqrt(E)
    c = cond_ref[...]                                          # bf16, straight to MXU
    h = jnp.dot(c, wh_ref[...],
                preferred_element_type=jnp.float32) + bh_ref[...]   # h_emb(cond)

    res = te + h                                               # hoisted residual (te+h is
    y = res                                                    # re-added after every layer)
    for l in range(layer_num):                                 # unrolled feed_forward
        z = jnp.dot(y.astype(jnp.bfloat16), wff_ref[l],
                    preferred_element_type=jnp.float32) + bff_ref[l]
        y = _gelu_exact(z) + res

    # Packed final projection: (tile_rows, P*E) @ block-diag (P*E, P) -> (tile_rows, P).
    out = jnp.dot(y.astype(jnp.bfloat16), wt_ref[...],
                  preferred_element_type=jnp.float32) + bt_ref[...]
    out_ref[...] = out


# ------------------------------- JAX glue ---------------------------------- #
def trigono_time_embedding(t, embed_size):
    half = embed_size // 2
    i = jnp.arange(half, dtype=jnp.float32)
    freqs = jnp.power(jnp.float32(10000.0), -2.0 * i / jnp.float32(embed_size))
    ang = t[..., None].astype(jnp.float32) * freqs             # (..., half)
    emb = jnp.stack([jnp.sin(ang), jnp.cos(ang)], axis=-1)     # interleave sin/cos
    return emb.reshape(*t.shape, embed_size)


def init_params(key, embed_size, layer_num):
    ks = jax.random.split(key, 6)
    bound = 1.0 / np.sqrt(embed_size)

    def lin(k, shape):
        return jax.random.uniform(k, shape, jnp.float32, -bound, bound)

    return dict(
        wh=lin(ks[0], (embed_size, embed_size)),
        bh=lin(ks[1], (1, embed_size)),
        wff=lin(ks[2], (layer_num, embed_size, embed_size)),
        bff=lin(ks[3], (layer_num, 1, embed_size)),
        wt=lin(ks[4], (embed_size, 1)),
        bt=lin(ks[5], (1, 1)),
    )


def _choose_tile_rows(n_rows, max_tile_rows):
    # Aim for >= ~8 grid steps (v7x 2-TC sharding + DMA/compute overlap) while keeping
    # each step big enough to amortize per-step overhead; never below the (16,128)
    # bf16 tile granularity, never above the VMEM-budgeted max.
    target = _round_up(max(MIN_TILE_ROWS, -(-n_rows // 8)), MIN_TILE_ROWS)
    return min(max_tile_rows, target)


@functools.partial(jax.jit, static_argnames=("layer_num", "pack", "max_tile_rows"))
def scorenet_forward(x, cond, params, *, layer_num=LAYER_NUM, pack=4,
                     max_tile_rows=MAX_TILE_ROWS):
    B, S = x.shape
    E = params["wh"].shape[0]
    L = params["wff"].shape[0]
    assert L == layer_num
    P = pack
    PE = P * E
    N = B * S

    n_rows = -(-N // P)
    tile_rows = _choose_tile_rows(n_rows, max_tile_rows)
    n_rows_pad = _round_up(n_rows, tile_rows)
    num_tiles = n_rows_pad // tile_rows
    pad = n_rows_pad * P - N

    # Time embedding + pad + bf16 cast fuse into one HBM pass under jit; the reshape
    # to the packed (n_rows, P*E) layout is row-major and free.
    te = trigono_time_embedding(x.reshape(-1), E)                       # (N, E) f32
    te_p = jnp.pad(te, ((0, pad), (0, 0))).astype(jnp.bfloat16).reshape(n_rows_pad, PE)
    c_p = (jnp.pad(cond.reshape(N, E), ((0, pad), (0, 0)))
           .astype(jnp.bfloat16).reshape(n_rows_pad, PE))

    # Block-diagonal weights (trace-time, tiny): each packed row is P independent tokens.
    eye_p = jnp.eye(P, dtype=jnp.float32)
    wh_bd = jnp.kron(eye_p, params["wh"]).astype(jnp.bfloat16)          # (PE, PE)
    bh_bd = jnp.tile(params["bh"], (1, P))                              # (1, PE) f32
    wff_bd = jnp.stack([jnp.kron(eye_p, params["wff"][l]) for l in range(L)]
                       ).astype(jnp.bfloat16)                           # (L, PE, PE)
    bff_bd = jnp.tile(params["bff"], (1, 1, P))                         # (L, 1, PE) f32
    wt_bd = jnp.kron(eye_p, params["wt"]).astype(jnp.bfloat16)          # (PE, P)
    bt_bd = jnp.tile(params["bt"], (1, P))                              # (1, P) f32

    kernel = functools.partial(_scorenet_kernel, layer_num, E)
    out = pl.pallas_call(
        kernel,
        out_shape=jax.ShapeDtypeStruct((n_rows_pad, P), jnp.float32),
        grid=(num_tiles,),
        in_specs=[
            pl.BlockSpec((tile_rows, PE), lambda i: (i, 0)),    # time embedding (streamed)
            pl.BlockSpec((tile_rows, PE), lambda i: (i, 0)),    # cond (streamed)
            pl.BlockSpec((PE, PE), lambda i: (0, 0)),           # h_emb weight (resident)
            pl.BlockSpec((1, PE), lambda i: (0, 0)),            # h_emb bias
            pl.BlockSpec((L, PE, PE), lambda i: (0, 0, 0)),     # feed_forward weights
            pl.BlockSpec((L, 1, PE), lambda i: (0, 0, 0)),      # feed_forward biases
            pl.BlockSpec((PE, P), lambda i: (0, 0)),            # to_time weight (block-diag)
            pl.BlockSpec((1, P), lambda i: (0, 0)),             # to_time bias
        ],
        out_specs=pl.BlockSpec((tile_rows, P), lambda i: (i, 0)),
        compiler_params=pltpu.CompilerParams(
            dimension_semantics=("parallel",),
            vmem_limit_bytes=32 * 1024 * 1024,
        ),
    )(te_p, c_p, wh_bd, bh_bd, wff_bd, bff_bd, wt_bd, bt_bd)

    # (n_rows_pad, P) row-major = token order; drop padding and restore (B, S).
    return out.reshape(-1)[:N].reshape(B, S)                    # .squeeze(dim=-1)


def scorenet_reference(x, cond, params, layer_num):
    """Pure-JAX f32 reference matching the PyTorch module."""
    E = params["wh"].shape[0]
    te = trigono_time_embedding(x, E) / np.sqrt(E)
    h = cond @ params["wh"] + params["bh"][0]
    y = te + h
    for l in range(layer_num):
        z = y @ params["wff"][l] + params["bff"][l, 0]
        y = 0.5 * z * (1.0 + jax.scipy.special.erf(z / np.sqrt(2.0))) + te + h
    return (y @ params["wt"] + params["bt"][0])[..., 0]


if __name__ == "__main__":
    key = jax.random.PRNGKey(0)
    k_param, k_x, k_cond = jax.random.split(key, 3)

    B, S = 2, 8
    params = init_params(k_param, EMBED_SIZE, LAYER_NUM)
    x = jax.random.uniform(k_x, (B, S), jnp.float32)             # diffusion "time" values
    cond = jax.random.normal(k_cond, (B, S, EMBED_SIZE), jnp.float32)

    out = scorenet_forward(x, cond, params, layer_num=LAYER_NUM, pack=_default_pack())
    out = jax.block_until_ready(out)
    assert out.shape == (B, S), out.shape
    assert jnp.all(jnp.isfinite(out))

    # Correctness vs. f32 reference (tolerances cover bf16 input/weight quantization).
    ref = scorenet_reference(x, cond, params, LAYER_NUM)
    assert jnp.allclose(out, ref, atol=5e-2, rtol=5e-2), (out, ref)

    print("KERNEL_OK")
</pallas_src>

<mosaic_0001>
module attributes {stable_mosaic.version = 11 : i64} {
  func.func @_scorenet_kernel(%arg0: i32, %arg1: memref<16x128xbf16, #tpu.memory_space<vmem>>, %arg2: memref<16x128xbf16, #tpu.memory_space<vmem>>, %arg3: memref<128x128xbf16, #tpu.memory_space<vmem>>, %arg4: memref<1x128xf32, #tpu.memory_space<vmem>>, %arg5: memref<3x128x128xbf16, #tpu.memory_space<vmem>>, %arg6: memref<3x1x128xf32, #tpu.memory_space<vmem>>, %arg7: memref<128x4xbf16, #tpu.memory_space<vmem>>, %arg8: memref<1x4xf32, #tpu.memory_space<vmem>>, %arg9: memref<16x4xf32, #tpu.memory_space<vmem>>) attributes {dimension_semantics = [#tpu.dimension_semantics<parallel>], iteration_bounds = array<i64: 1>, scalar_prefetch = 0 : i64, scratch_operands = 0 : i64, tpu.core_type = #tpu.core_type<tc>, window_params = [{transform_indices = @transform_0, window_bounds = array<i64: 16, 128>}, {transform_indices = @transform_1, window_bounds = array<i64: 16, 128>}, {pipeline_mode = #tpu.pipeline_mode<synchronous>, transform_indices = @transform_2, window_bounds = array<i64: 128, 128>}, {pipeline_mode = #tpu.pipeline_mode<synchronous>, transform_indices = @transform_3, window_bounds = array<i64: 1, 128>}, {pipeline_mode = #tpu.pipeline_mode<synchronous>, transform_indices = @transform_4, window_bounds = array<i64: 3, 128, 128>}, {pipeline_mode = #tpu.pipeline_mode<synchronous>, transform_indices = @transform_5, window_bounds = array<i64: 3, 1, 128>}, {pipeline_mode = #tpu.pipeline_mode<synchronous>, transform_indices = @transform_6, window_bounds = array<i64: 128, 4>}, {pipeline_mode = #tpu.pipeline_mode<synchronous>, transform_indices = @transform_7, window_bounds = array<i64: 1, 4>}, {transform_indices = @transform_8, window_bounds = array<i64: 16, 4>}]} {
    %c0 = arith.constant 0 : index
    %c0_0 = arith.constant 0 : index
    %0 = vector.load %arg1[%c0, %c0_0] : memref<16x128xbf16, #tpu.memory_space<vmem>>, vector<16x128xbf16>
    %1 = arith.extf %0 : vector<16x128xbf16> to vector<16x128xf32>
    %cst = arith.constant 0.176776692 : f32
    %2 = vector.broadcast %cst : f32 to vector<16x128xf32>
    %3 = arith.mulf %1, %2 : vector<16x128xf32>
    %c0_1 = arith.constant 0 : index
    %c0_2 = arith.constant 0 : index
    %4 = vector.load %arg2[%c0_1, %c0_2] : memref<16x128xbf16, #tpu.memory_space<vmem>>, vector<16x128xbf16>
    %c0_3 = arith.constant 0 : index
    %c0_4 = arith.constant 0 : index
    %5 = vector.load %arg3[%c0_3, %c0_4] : memref<128x128xbf16, #tpu.memory_space<vmem>>, vector<128x128xbf16>
    %cst_5 = arith.constant dense<0.000000e+00> : vector<16x128xf32>
    %6 = tpu.matmul %4, %5, %cst_5 {dimension_numbers = #tpu.dot_dimension_numbers<[1], [0], [0], [1], [0, 0, 1, 1], [], []>} : vector<16x128xbf16>, vector<128x128xbf16>, vector<16x128xf32> -> vector<16x128xf32>
    %c0_6 = arith.constant 0 : index
    %c0_7 = arith.constant 0 : index
    %7 = vector.load %arg4[%c0_6, %c0_7] : memref<1x128xf32, #tpu.memory_space<vmem>>, vector<1x128xf32>
    %8 = vector.broadcast %7 : vector<1x128xf32> to vector<16x128xf32>
    %9 = arith.addf %6, %8 : vector<16x128xf32>
    %10 = arith.addf %3, %9 : vector<16x128xf32>
    %11 = arith.truncf %10 : vector<16x128xf32> to vector<16x128xbf16>
    %c0_8 = arith.constant 0 : index
    %c0_9 = arith.constant 0 : index
    %c0_10 = arith.constant 0 : index
    %12 = vector.load %arg5[%c0_8, %c0_9, %c0_10] : memref<3x128x128xbf16, #tpu.memory_space<vmem>>, vector<1x128x128xbf16>
    %13 = vector.shape_cast %12 : vector<1x128x128xbf16> to vector<128x128xbf16>
    %cst_11 = arith.constant dense<0.000000e+00> : vector<16x128xf32>
    %14 = tpu.matmul %11, %13, %cst_11 {dimension_numbers = #tpu.dot_dimension_numbers<[1], [0], [0], [1], [0, 0, 1, 1], [], []>} : vector<16x128xbf16>, vector<128x128xbf16>, vector<16x128xf32> -> vector<16x128xf32>
    %c0_12 = arith.constant 0 : index
    %c0_13 = arith.constant 0 : index
    %c0_14 = arith.constant 0 : index
    %15 = vector.load %arg6[%c0_12, %c0_13, %c0_14] : memref<3x1x128xf32, #tpu.memory_space<vmem>>, vector<1x1x128xf32>
    %16 = vector.shape_cast %15 : vector<1x1x128xf32> to vector<1x128xf32>
    %17 = vector.broadcast %16 : vector<1x128xf32> to vector<16x128xf32>
    %18 = arith.addf %14, %17 : vector<16x128xf32>
    %cst_15 = arith.constant 5.000000e-01 : f32
    %19 = vector.broadcast %cst_15 : f32 to vector<16x128xf32>
    %20 = arith.mulf %19, %18 : vector<16x128xf32>
    %cst_16 = arith.constant 0.707106769 : f32
    %21 = vector.broadcast %cst_16 : f32 to vector<16x128xf32>
    %22 = arith.mulf %18, %21 : vector<16x128xf32>
    %cst_17 = arith.constant 0.000000e+00 : f32
    %23 = vector.broadcast %cst_17 : f32 to vector<16x128xf32>
    %24 = arith.cmpf oge, %22, %23 : vector<16x128xf32>
    %cst_18 = arith.constant 1.000000e+00 : f32
    %cst_19 = arith.constant -1.000000e+00 : f32
    %25 = vector.broadcast %cst_18 : f32 to vector<16x128xf32>
    %26 = vector.broadcast %cst_19 : f32 to vector<16x128xf32>
    %27 = arith.select %24, %25, %26 : vector<16x128xi1>, vector<16x128xf32>
    %28 = math.absf %22 : vector<16x128xf32>
    %cst_20 = arith.constant 0.327591091 : f32
    %29 = vector.broadcast %cst_20 : f32 to vector<16x128xf32>
    %30 = arith.mulf %29, %28 : vector<16x128xf32>
    %cst_21 = arith.constant 1.000000e+00 : f32
    %31 = vector.broadcast %cst_21 : f32 to vector<16x128xf32>
    %32 = arith.addf %31, %30 : vector<16x128xf32>
    %cst_22 = arith.constant 1.000000e+00 : f32
    %33 = vector.broadcast %cst_22 : f32 to vector<16x128xf32>
    %34 = arith.divf %33, %32 : vector<16x128xf32>
    %cst_23 = arith.constant 1.06140542 : f32
    %35 = vector.broadcast %cst_23 : f32 to vector<16x128xf32>
    %36 = arith.mulf %35, %34 : vector<16x128xf32>
    %cst_24 = arith.constant -1.45315206 : f32
    %37 = vector.broadcast %cst_24 : f32 to vector<16x128xf32>
    %38 = arith.addf %36, %37 : vector<16x128xf32>
    %39 = arith.mulf %38, %34 : vector<16x128xf32>
    %cst_25 = arith.constant 1.42141378 : f32
    %40 = vector.broadcast %cst_25 : f32 to vector<16x128xf32>
    %41 = arith.addf %39, %40 : vector<16x128xf32>
    %42 = arith.mulf %41, %34 : vector<16x128xf32>
    %cst_26 = arith.constant -0.284496725 : f32
    %43 = vector.broadcast %cst_26 : f32 to vector<16x128xf32>
    %44 = arith.addf %42, %43 : vector<16x128xf32>
    %45 = arith.mulf %44, %34 : vector<16x128xf32>
    %cst_27 = arith.constant 0.254829586 : f32
    %46 = vector.broadcast %cst_27 : f32 to vector<16x128xf32>
    %47 = arith.addf %45, %46 : vector<16x128xf32>
    %48 = arith.mulf %47, %34 : vector<16x128xf32>
    %cst_28 = arith.constant 0.000000e+00 : f32
    %49 = vector.broadcast %cst_28 : f32 to vector<16x128xf32>
    %50 = arith.subf %49, %28 : vector<16x128xf32>
    %51 = arith.mulf %50, %28 : vector<16x128xf32>
    %52 = math.exp %51 : vector<16x128xf32>
    %53 = arith.mulf %48, %52 : vector<16x128xf32>
    %cst_29 = arith.constant 1.000000e+00 : f32
    %54 = vector.broadcast %cst_29 : f32 to vector<16x128xf32>
    %55 = arith.subf %54, %53 : vector<16x128xf32>
    %56 = arith.mulf %27, %55 : vector<16x128xf32>
    %cst_30 = arith.constant 1.000000e+00 : f32
    %57 = vector.broadcast %cst_30 : f32 to vector<16x128xf32>
    %58 = arith.addf %57, %56 : vector<16x128xf32>
    %59 = arith.mulf %20, %58 : vector<16x128xf32>
    %60 = arith.addf %59, %10 : vector<16x128xf32>
    %61 = arith.truncf %60 : vector<16x128xf32> to vector<16x128xbf16>
    %c1 = arith.constant 1 : index
    %c0_31 = arith.constant 0 : index
    %c0_32 = arith.constant 0 : index
    %62 = vector.load %arg5[%c1, %c0_31, %c0_32] : memref<3x128x128xbf16, #tpu.memory_space<vmem>>, vector<1x128x128xbf16>
    %63 = vector.shape_cast %62 : vector<1x128x128xbf16> to vector<128x128xbf16>
    %cst_33 = arith.constant dense<0.000000e+00> : vector<16x128xf32>
    %64 = tpu.matmul %61, %63, %cst_33 {dimension_numbers = #tpu.dot_dimension_numbers<[1], [0], [0], [1], [0, 0, 1, 1], [], []>} : vector<16x128xbf16>, vector<128x128xbf16>, vector<16x128xf32> -> vector<16x128xf32>
    %c1_34 = arith.constant 1 : index
    %c0_35 = arith.constant 0 : index
    %c0_36 = arith.constant 0 : index
    %65 = vector.load %arg6[%c1_34, %c0_35, %c0_36] : memref<3x1x128xf32, #tpu.memory_space<vmem>>, vector<1x1x128xf32>
    %66 = vector.shape_cast %65 : vector<1x1x128xf32> to vector<1x128xf32>
    %67 = vector.broadcast %66 : vector<1x128xf32> to vector<16x128xf32>
    %68 = arith.addf %64, %67 : vector<16x128xf32>
    %cst_37 = arith.constant 5.000000e-01 : f32
    %69 = vector.broadcast %cst_37 : f32 to vector<16x128xf32>
    %70 = arith.mulf %69, %68 : vector<16x128xf32>
    %cst_38 = arith.constant 0.707106769 : f32
    %71 = vector.broadcast %cst_38 : f32 to vector<16x128xf32>
    %72 = arith.mulf %68, %71 : vector<16x128xf32>
    %cst_39 = arith.constant 0.000000e+00 : f32
    %73 = vector.broadcast %cst_39 : f32 to vector<16x128xf32>
    %74 = arith.cmpf oge, %72, %73 : vector<16x128xf32>
    %cst_40 = arith.constant 1.000000e+00 : f32
    %cst_41 = arith.constant -1.000000e+00 : f32
    %75 = vector.broadcast %cst_40 : f32 to vector<16x128xf32>
    %76 = vector.broadcast %cst_41 : f32 to vector<16x128xf32>
    %77 = arith.select %74, %75, %76 : vector<16x128xi1>, vector<16x128xf32>
    %78 = math.absf %72 : vector<16x128xf32>
    %cst_42 = arith.constant 0.327591091 : f32
    %79 = vector.broadcast %cst_42 : f32 to vector<16x128xf32>
    %80 = arith.mulf %79, %78 : vector<16x128xf32>
    %cst_43 = arith.constant 1.000000e+00 : f32
    %81 = vector.broadcast %cst_43 : f32 to vector<16x128xf32>
    %82 = arith.addf %81, %80 : vector<16x128xf32>
    %cst_44 = arith.constant 1.000000e+00 : f32
    %83 = vector.broadcast %cst_44 : f32 to vector<16x128xf32>
    %84 = arith.divf %83, %82 : vector<16x128xf32>
    %cst_45 = arith.constant 1.06140542 : f32
    %85 = vector.broadcast %cst_45 : f32 to vector<16x128xf32>
    %86 = arith.mulf %85, %84 : vector<16x128xf32>
    %cst_46 = arith.constant -1.45315206 : f32
    %87 = vector.broadcast %cst_46 : f32 to vector<16x128xf32>
    %88 = arith.addf %86, %87 : vector<16x128xf32>
    %89 = arith.mulf %88, %84 : vector<16x128xf32>
    %cst_47 = arith.constant 1.42141378 : f32
    %90 = vector.broadcast %cst_47 : f32 to vector<16x128xf32>
    %91 = arith.addf %89, %90 : vector<16x128xf32>
    %92 = arith.mulf %91, %84 : vector<16x128xf32>
    %cst_48 = arith.constant -0.284496725 : f32
    %93 = vector.broadcast %cst_48 : f32 to vector<16x128xf32>
    %94 = arith.addf %92, %93 : vector<16x128xf32>
    %95 = arith.mulf %94, %84 : vector<16x128xf32>
    %cst_49 = arith.constant 0.254829586 : f32
    %96 = vector.broadcast %cst_49 : f32 to vector<16x128xf32>
    %97 = arith.addf %95, %96 : vector<16x128xf32>
    %98 = arith.mulf %97, %84 : vector<16x128xf32>
    %cst_50 = arith.constant 0.000000e+00 : f32
    %99 = vector.broadcast %cst_50 : f32 to vector<16x128xf32>
    %100 = arith.subf %99, %78 : vector<16x128xf32>
    %101 = arith.mulf %100, %78 : vector<16x128xf32>
    %102 = math.exp %101 : vector<16x128xf32>
    %103 = arith.mulf %98, %102 : vector<16x128xf32>
    %cst_51 = arith.constant 1.000000e+00 : f32
    %104 = vector.broadcast %cst_51 : f32 to vector<16x128xf32>
    %105 = arith.subf %104, %103 : vector<16x128xf32>
    %106 = arith.mulf %77, %105 : vector<16x128xf32>
    %cst_52 = arith.constant 1.000000e+00 : f32
    %107 = vector.broadcast %cst_52 : f32 to vector<16x128xf32>
    %108 = arith.addf %107, %106 : vector<16x128xf32>
    %109 = arith.mulf %70, %108 : vector<16x128xf32>
    %110 = arith.addf %109, %10 : vector<16x128xf32>
    %111 = arith.truncf %110 : vector<16x128xf32> to vector<16x128xbf16>
    %c2 = arith.constant 2 : index
    %c0_53 = arith.constant 0 : index
    %c0_54 = arith.constant 0 : index
    %112 = vector.load %arg5[%c2, %c0_53, %c0_54] : memref<3x128x128xbf16, #tpu.memory_space<vmem>>, vector<1x128x128xbf16>
    %113 = vector.shape_cast %112 : vector<1x128x128xbf16> to vector<128x128xbf16>
    %cst_55 = arith.constant dense<0.000000e+00> : vector<16x128xf32>
    %114 = tpu.matmul %111, %113, %cst_55 {dimension_numbers = #tpu.dot_dimension_numbers<[1], [0], [0], [1], [0, 0, 1, 1], [], []>} : vector<16x128xbf16>, vector<128x128xbf16>, vector<16x128xf32> -> vector<16x128xf32>
    %c2_56 = arith.constant 2 : index
    %c0_57 = arith.constant 0 : index
    %c0_58 = arith.constant 0 : index
    %115 = vector.load %arg6[%c2_56, %c0_57, %c0_58] : memref<3x1x128xf32, #tpu.memory_space<vmem>>, vector<1x1x128xf32>
    %116 = vector.shape_cast %115 : vector<1x1x128xf32> to vector<1x128xf32>
    %117 = vector.broadcast %116 : vector<1x128xf32> to vector<16x128xf32>
    %118 = arith.addf %114, %117 : vector<16x128xf32>
    %cst_59 = arith.constant 5.000000e-01 : f32
    %119 = vector.broadcast %cst_59 : f32 to vector<16x128xf32>
    %120 = arith.mulf %119, %118 : vector<16x128xf32>
    %cst_60 = arith.constant 0.707106769 : f32
    %121 = vector.broadcast %cst_60 : f32 to vector<16x128xf32>
    %122 = arith.mulf %118, %121 : vector<16x128xf32>
    %cst_61 = arith.constant 0.000000e+00 : f32
    %123 = vector.broadcast %cst_61 : f32 to vector<16x128xf32>
    %124 = arith.cmpf oge, %122, %123 : vector<16x128xf32>
    %cst_62 = arith.constant 1.000000e+00 : f32
    %cst_63 = arith.constant -1.000000e+00 : f32
    %125 = vector.broadcast %cst_62 : f32 to vector<16x128xf32>
    %126 = vector.broadcast %cst_63 : f32 to vector<16x128xf32>
    %127 = arith.select %124, %125, %126 : vector<16x128xi1>, vector<16x128xf32>
    %128 = math.absf %122 : vector<16x128xf32>
    %cst_64 = arith.constant 0.327591091 : f32
    %129 = vector.broadcast %cst_64 : f32 to vector<16x128xf32>
    %130 = arith.mulf %129, %128 : vector<16x128xf32>
    %cst_65 = arith.constant 1.000000e+00 : f32
    %131 = vector.broadcast %cst_65 : f32 to vector<16x128xf32>
    %132 = arith.addf %131, %130 : vector<16x128xf32>
    %cst_66 = arith.constant 1.000000e+00 : f32
    %133 = vector.broadcast %cst_66 : f32 to vector<16x128xf32>
    %134 = arith.divf %133, %132 : vector<16x128xf32>
    %cst_67 = arith.constant 1.06140542 : f32
    %135 = vector.broadcast %cst_67 : f32 to vector<16x128xf32>
    %136 = arith.mulf %135, %134 : vector<16x128xf32>
    %cst_68 = arith.constant -1.45315206 : f32
    %137 = vector.broadcast %cst_68 : f32 to vector<16x128xf32>
    %138 = arith.addf %136, %137 : vector<16x128xf32>
    %139 = arith.mulf %138, %134 : vector<16x128xf32>
    %cst_69 = arith.constant 1.42141378 : f32
    %140 = vector.broadcast %cst_69 : f32 to vector<16x128xf32>
    %141 = arith.addf %139, %140 : vector<16x128xf32>
    %142 = arith.mulf %141, %134 : vector<16x128xf32>
    %cst_70 = arith.constant -0.284496725 : f32
    %143 = vector.broadcast %cst_70 : f32 to vector<16x128xf32>
    %144 = arith.addf %142, %143 : vector<16x128xf32>
    %145 = arith.mulf %144, %134 : vector<16x128xf32>
    %cst_71 = arith.constant 0.254829586 : f32
    %146 = vector.broadcast %cst_71 : f32 to vector<16x128xf32>
    %147 = arith.addf %145, %146 : vector<16x128xf32>
    %148 = arith.mulf %147, %134 : vector<16x128xf32>
    %cst_72 = arith.constant 0.000000e+00 : f32
    %149 = vector.broadcast %cst_72 : f32 to vector<16x128xf32>
    %150 = arith.subf %149, %128 : vector<16x128xf32>
    %151 = arith.mulf %150, %128 : vector<16x128xf32>
    %152 = math.exp %151 : vector<16x128xf32>
    %153 = arith.mulf %148, %152 : vector<16x128xf32>
    %cst_73 = arith.constant 1.000000e+00 : f32
    %154 = vector.broadcast %cst_73 : f32 to vector<16x128xf32>
    %155 = arith.subf %154, %153 : vector<16x128xf32>
    %156 = arith.mulf %127, %155 : vector<16x128xf32>
    %cst_74 = arith.constant 1.000000e+00 : f32
    %157 = vector.broadcast %cst_74 : f32 to vector<16x128xf32>
    %158 = arith.addf %157, %156 : vector<16x128xf32>
    %159 = arith.mulf %120, %158 : vector<16x128xf32>
    %160 = arith.addf %159, %10 : vector<16x128xf32>
    %161 = arith.truncf %160 : vector<16x128xf32> to vector<16x128xbf16>
    %c0_75 = arith.constant 0 : index
    %c0_76 = arith.constant 0 : index
    %162 = vector.load %arg7[%c0_75, %c0_76] : memref<128x4xbf16, #tpu.memory_space<vmem>>, vector<128x4xbf16>
    %cst_77 = arith.constant dense<0.000000e+00> : vector<16x4xf32>
    %163 = tpu.matmul %161, %162, %cst_77 {dimension_numbers = #tpu.dot_dimension_numbers<[1], [0], [0], [1], [0, 0, 1, 1], [], []>} : vector<16x128xbf16>, vector<128x4xbf16>, vector<16x4xf32> -> vector<16x4xf32>
    %c0_78 = arith.constant 0 : index
    %c0_79 = arith.constant 0 : index
    %164 = vector.load %arg8[%c0_78, %c0_79] : memref<1x4xf32, #tpu.memory_space<vmem>>, vector<1x4xf32>
    %165 = vector.broadcast %164 : vector<1x4xf32> to vector<16x4xf32>
    %166 = arith.addf %163, %165 : vector<16x4xf32>
    %c0_80 = arith.constant 0 : index
    %c0_81 = arith.constant 0 : index
    %167 = vector.load %arg9[%c0_80, %c0_81] : memref<16x4xf32, #tpu.memory_space<vmem>>, vector<16x4xf32>
    tpu.vector_store %arg9[%c0_80, %c0_81], %166 {strides = array<i32>} : memref<16x4xf32, #tpu.memory_space<vmem>>, vector<16x4xf32>,
    return
  }
  func.func @transform_0(%arg0: i32) -> (i32, i32) {
    %c0_i32 = arith.constant 0 : i32
    %c0_i32_0 = arith.constant 0 : i32
    return %arg0, %c0_i32 : i32, i32
  }
  func.func @transform_1(%arg0: i32) -> (i32, i32) {
    %c0_i32 = arith.constant 0 : i32
    %c0_i32_0 = arith.constant 0 : i32
    return %arg0, %c0_i32 : i32, i32
  }
  func.func @transform_2(%arg0: i32) -> (i32, i32) {
    %c0_i32 = arith.constant 0 : i32
    %c0_i32_0 = arith.constant 0 : i32
    %c0_i32_1 = arith.constant 0 : i32
    return %c0_i32, %c0_i32_0 : i32, i32
  }
  func.func @transform_3(%arg0: i32) -> (i32, i32) {
    %c0_i32 = arith.constant 0 : i32
    %c0_i32_0 = arith.constant 0 : i32
    %c0_i32_1 = arith.constant 0 : i32
    return %c0_i32, %c0_i32_0 : i32, i32
  }
  func.func @transform_4(%arg0: i32) -> (i32, i32, i32) {
    %c0_i32 = arith.constant 0 : i32
    %c0_i32_0 = arith.constant 0 : i32
    %c0_i32_1 = arith.constant 0 : i32
    %c0_i32_2 = arith.constant 0 : i32
    return %c0_i32, %c0_i32_0, %c0_i32_1 : i32, i32, i32
  }
  func.func @transform_5(%arg0: i32) -> (i32, i32, i32) {
    %c0_i32 = arith.constant 0 : i32
    %c0_i32_0 = arith.constant 0 : i32
    %c0_i32_1 = arith.constant 0 : i32
    %c0_i32_2 = arith.constant 0 : i32
    return %c0_i32, %c0_i32_0, %c0_i32_1 : i32, i32, i32
  }
  func.func @transform_6(%arg0: i32) -> (i32, i32) {
    %c0_i32 = arith.constant 0 : i32
    %c0_i32_0 = arith.constant 0 : i32
    %c0_i32_1 = arith.constant 0 : i32
    return %c0_i32, %c0_i32_0 : i32, i32
  }
  func.func @transform_7(%arg0: i32) -> (i32, i32) {
    %c0_i32 = arith.constant 0 : i32
    %c0_i32_0 = arith.constant 0 : i32
    %c0_i32_1 = arith.constant 0 : i32
    return %c0_i32, %c0_i32_0 : i32, i32
  }
  func.func @transform_8(%arg0: i32) -> (i32, i32) {
    %c0_i32 = arith.constant 0 : i32
    %c0_i32_0 = arith.constant 0 : i32
    return %arg0, %c0_i32 : i32, i32
  }
}

</mosaic_0001>

<llo_original>
// kernel: scorenet_forward.1
$region0: #{scorenet_forward.1}
  #allocation0 [shape = 'u32[]', space=smem, size = 0x4, offset = 0x4, fixed_abs, tag = 'smem constant byte address 0x4 - core index']
  #allocation1 [shape = 'u32[144,128]{1,0:T(1,128)}', space=vmem, size = 0x12000, scoped, tag = 'internal scratch']
  %s0 = inlined_call_operand.vmem [shape: bf16[16,128], index: 0, kind: input, shape index: {}]
  %s1 = inlined_call_operand.vmem [shape: bf16[16,128], index: 1, kind: input, shape index: {}]
  %s2 = inlined_call_operand.vmem [shape: bf16[128,128], index: 2, kind: input, shape index: {}]
  %s3 = inlined_call_operand.vmem [shape: f32[1,128], index: 3, kind: input, shape index: {}]
  %s4 = inlined_call_operand.vmem [shape: bf16[3,128,128], index: 4, kind: input, shape index: {}]
  %s5 = inlined_call_operand.vmem [shape: f32[3,1,128], index: 5, kind: input, shape index: {}]
  %s6 = inlined_call_operand.vmem [shape: bf16[128,4], index: 6, kind: input, shape index: {}]
  %s7 = inlined_call_operand.vmem [shape: f32[1,4], index: 7, kind: input, shape index: {}]
  %s8 = inlined_call_operand.vmem [shape: f32[16,4], index: 8, kind: output, shape index: {}]
  %s9 = sld [smem:[#allocation0]]
  $region42: #{scorenet_forward.1} parent=0
    _
  %s11 = ssub.s32 1, %s9
  %s12 = scalar_select 0, %s11, %s9
  // Predicated region
  $region2: #{scorenet_forward.1} parent=0 // pred_check
    _
  $region3: #{scorenet_forward.1} parent=0 // pred_check_branch
    %14 = sbr.rel (0) target = $region5
  $region4: #{scorenet_forward.1} parent=0 // pred_region
    _
  $region5: #{scorenet_forward.1} parent=0 // pred_fallthru
    _
  // Predicated region
  $region6: #{scorenet_forward.1} parent=0 // pred_check
    _
  $region7: #{scorenet_forward.1} parent=0 // pred_check_branch
    %16 = sbr.rel (0) target = $region9
  $region8: #{scorenet_forward.1} parent=0 // pred_region
    _
  $region9: #{scorenet_forward.1} parent=0 // pred_fallthru
    _
  // Predicated region
  $region10: #{scorenet_forward.1} parent=0 // pred_check
    _
  $region11: #{scorenet_forward.1} parent=0 // pred_check_branch
    %18 = sbr.rel (0) target = $region13
  $region12: #{scorenet_forward.1} parent=0 // pred_region
    _
  $region13: #{scorenet_forward.1} parent=0 // pred_fallthru
    _
  // Predicated region
  $region14: #{scorenet_forward.1} parent=0 // pred_check
    _
  $region15: #{scorenet_forward.1} parent=0 // pred_check_branch
    %20 = sbr.rel (0) target = $region17
  $region16: #{scorenet_forward.1} parent=0 // pred_region
    _
  $region17: #{scorenet_forward.1} parent=0 // pred_fallthru
    _
  // Predicated region
  $region18: #{scorenet_forward.1} parent=0 // pred_check
    _
  $region19: #{scorenet_forward.1} parent=0 // pred_check_branch
    %22 = sbr.rel (0) target = $region21
  $region20: #{scorenet_forward.1} parent=0 // pred_region
    _
  $region21: #{scorenet_forward.1} parent=0 // pred_fallthru
    _
  // Predicated region
  $region22: #{scorenet_forward.1} parent=0 // pred_check
    _
  $region23: #{scorenet_forward.1} parent=0 // pred_check_branch
    %24 = sbr.rel (0) target = $region25
  $region24: #{scorenet_forward.1} parent=0 // pred_region
    _
  $region25: #{scorenet_forward.1} parent=0 // pred_fallthru
    _
  // Predicated region
  $region26: #{scorenet_forward.1} parent=0 // pred_check
    _
  $region27: #{scorenet_forward.1} parent=0 // pred_check_branch
    %26 = sbr.rel (0) target = $region29
  $region28: #{scorenet_forward.1} parent=0 // pred_region
    _
  $region29: #{scorenet_forward.1} parent=0 // pred_fallthru
    _
  // Predicated region
  $region30: #{scorenet_forward.1} parent=0 // pred_check
    _
  $region31: #{scorenet_forward.1} parent=0 // pred_check_branch
    %28 = sbr.rel (0) target = $region33
  $region32: #{scorenet_forward.1} parent=0 // pred_region
    _
  $region33: #{scorenet_forward.1} parent=0 // pred_fallthru
    _
  %v30 = vld [vmem:[%s0] sm:$0xf]
  %v31 = vld [vmem:[%s0 + $0x4] sm:$0xf]
  %v32 = vunpack.c.l.bf16 %v30
  %v33 = vunpack.c.l.bf16 %v31
  %v34 = vmul.f32 %v32, 0.17677669
  %v35 = vmul.f32 %v33, 0.17677669
  %v36 = vld [vmem:[%s1] sm:$0xf]
  %v37 = vld [vmem:[%s1 + $0x4] sm:$0xf]
  %v38 = vld [vmem:[%s2] sm:$0xf]
  %v39 = vld [vmem:[%s2 + $0x4] sm:$0xf]
  %v40 = vld [vmem:[%s2 + $0x8] sm:$0xf]
  %v41 = vld [vmem:[%s2 + $0xc] sm:$0xf]
  %v42 = vld [vmem:[%s2 + $0x10] sm:$0xf]
  %v43 = vld [vmem:[%s2 + $0x14] sm:$0xf]
  %v44 = vld [vmem:[%s2 + $0x18] sm:$0xf]
  %v45 = vld [vmem:[%s2 + $0x1c] sm:$0xf]
  %v46 = vld [vmem:[%s2 + $0x20] sm:$0xf]
  %v47 = vld [vmem:[%s2 + $0x24] sm:$0xf]
  %v48 = vld [vmem:[%s2 + $0x28] sm:$0xf]
  %v49 = vld [vmem:[%s2 + $0x2c] sm:$0xf]
  %v50 = vld [vmem:[%s2 + $0x30] sm:$0xf]
  %v51 = vld [vmem:[%s2 + $0x34] sm:$0xf]
  %v52 = vld [vmem:[%s2 + $0x38] sm:$0xf]
  %v53 = vld [vmem:[%s2 + $0x3c] sm:$0xf]
  %v54 = vld [vmem:[%s3] sm:$0x1]
  %v56 = vlaneseq
  %v57 = vshrl.u32 %v56, 7
  %v58 = vsub.s32 0, %v57
  %v59 = vrot.slane %v54, %v58
  %v63 = vunpack.c.l.b16 %v36
  %v64 = vunpack.c.l.b16 %v37
  %v65 = vpack.c.b16 %v64, %v63
  %v83 = vunpack.c.l.b16 %v38
  %v84 = vunpack.c.l.b16 %v39
  %v85 = vunpack.c.l.b16 %v40
  %v86 = vunpack.c.l.b16 %v41
  %v87 = vunpack.c.l.b16 %v42
  %v88 = vunpack.c.l.b16 %v43
  %v89 = vunpack.c.l.b16 %v44
  %v90 = vunpack.c.l.b16 %v45
  %v91 = vunpack.c.l.b16 %v46
  %v92 = vunpack.c.l.b16 %v47
  %v93 = vunpack.c.l.b16 %v48
  %v94 = vunpack.c.l.b16 %v49
  %v95 = vunpack.c.l.b16 %v50
  %v96 = vunpack.c.l.b16 %v51
  %v97 = vunpack.c.l.b16 %v52
  %v98 = vunpack.c.l.b16 %v53
  %v99 = vpack.c.b16 %v84, %v83
  %v100 = vpack.c.b16 %v86, %v85
  %v101 = vpack.c.b16 %v88, %v87
  %v102 = vpack.c.b16 %v90, %v89
  %v103 = vpack.c.b16 %v92, %v91
  %v104 = vpack.c.b16 %v94, %v93
  %v105 = vpack.c.b16 %v96, %v95
  %v106 = vpack.c.b16 %v98, %v97
  %115 = vmatprep.subr.bf16.mxu0 0
  %116 = vmatpush1.bf16.msra.mxu0 %v99
  %117 = vmatprep.subr.bf16.mxu0 0
  %118 = vmatpush1.bf16.msra.mxu0 %v100
  %119 = vmatprep.subr.bf16.mxu0 0
  %120 = vmatpush1.bf16.msra.mxu0 %v101
  %121 = vmatprep.subr.bf16.mxu0 0
  %122 = vmatpush1.bf16.msra.mxu0 %v102
  %123 = vmatprep.subr.bf16.mxu0 0
  %124 = vmatpush1.bf16.msra.mxu0 %v103
  %125 = vmatprep.subr.bf16.mxu0 0
  %126 = vmatpush1.bf16.msra.mxu0 %v104
  %127 = vmatprep.subr.bf16.mxu0 0
  %128 = vmatpush1.bf16.msra.mxu0 %v105
  %129 = vmatprep.subr.bf16.mxu0 0
  %130 = vmatpush1.bf16.msra.mxu0 %v106
  %131 = vmatprep.subr.bf16.mxu0 0
  %132 = vmatpush1.bf16.msra.mxu0 0
  %133 = vmatprep.subr.bf16.mxu0 0
  %134 = vmatpush1.bf16.msra.mxu0 0
  %135 = vmatprep.subr.bf16.mxu0 0
  %136 = vmatpush1.bf16.msra.mxu0 0
  %137 = vmatprep.subr.bf16.mxu0 0
  %138 = vmatpush1.bf16.msra.mxu0 0
  %139 = vmatprep.subr.bf16.mxu0 0
  %140 = vmatpush1.bf16.msra.mxu0 0
  %141 = vmatprep.subr.bf16.mxu0 0
  %142 = vmatpush1.bf16.msra.mxu0 0
  %143 = vmatprep.subr.bf16.mxu0 0
  %144 = vmatpush1.bf16.msra.mxu0 0
  %145 = vmatprep.subr.bf16.mxu0 0
  %146 = vmatpush1.bf16.msra.mxu0 0
  %147 = vmatprep.mubr.bf16.mxu0 0
  %148 = vmatmul.mubr.bf16.gmra.mrb[0].mxu0 %v65
  %v149 = vpop.f32.mrb[0].mxu0
  %v150 = vadd.f32 %v59, %v149
  %v151 = vpop.f32.mrb[0].mxu0
  %v152 = vpop.f32.mrb[0].mxu0
  %v153 = vadd.f32 %v59, %v152
  %v154 = vpop.f32.mrb[0].mxu0
  %155 = vdwg.mxu0
  %v156 = vadd.f32 %v34, %v150
  %v157 = vadd.f32 %v35, %v153
  %v158 = vpack.c.bf16 %v157, %v156
  %v159 = vld [vmem:[%s4] sm:$0xf]
  %v160 = vld [vmem:[%s4 + $0x4] sm:$0xf]
  %v161 = vld [vmem:[%s4 + $0x8] sm:$0xf]
  %v162 = vld [vmem:[%s4 + $0xc] sm:$0xf]
  %v163 = vld [vmem:[%s4 + $0x10] sm:$0xf]
  %v164 = vld [vmem:[%s4 + $0x14] sm:$0xf]
  %v165 = vld [vmem:[%s4 + $0x18] sm:$0xf]
  %v166 = vld [vmem:[%s4 + $0x1c] sm:$0xf]
  %v167 = vld [vmem:[%s4 + $0x20] sm:$0xf]
  %v168 = vld [vmem:[%s4 + $0x24] sm:$0xf]
  %v169 = vld [vmem:[%s4 + $0x28] sm:$0xf]
  %v170 = vld [vmem:[%s4 + $0x2c] sm:$0xf]
  %v171 = vld [vmem:[%s4 + $0x30] sm:$0xf]
  %v172 = vld [vmem:[%s4 + $0x34] sm:$0xf]
  %v173 = vld [vmem:[%s4 + $0x38] sm:$0xf]
  %v174 = vld [vmem:[%s4 + $0x3c] sm:$0xf]
  %v175 = vld [vmem:[%s5] sm:$0x1]
  %v177 = vlaneseq
  %v178 = vshrl.u32 %v177, 7
  %v179 = vsub.s32 0, %v178
  %v180 = vrot.slane %v175, %v179
  %v198 = vunpack.c.l.b16 %v159
  %v199 = vunpack.c.l.b16 %v160
  %v200 = vunpack.c.l.b16 %v161
  %v201 = vunpack.c.l.b16 %v162
  %v202 = vunpack.c.l.b16 %v163
  %v203 = vunpack.c.l.b16 %v164
  %v204 = vunpack.c.l.b16 %v165
  %v205 = vunpack.c.l.b16 %v166
  %v206 = vunpack.c.l.b16 %v167
  %v207 = vunpack.c.l.b16 %v168
  %v208 = vunpack.c.l.b16 %v169
  %v209 = vunpack.c.l.b16 %v170
  %v210 = vunpack.c.l.b16 %v171
  %v211 = vunpack.c.l.b16 %v172
  %v212 = vunpack.c.l.b16 %v173
  %v213 = vunpack.c.l.b16 %v174
  %v214 = vpack.c.b16 %v199, %v198
  %v215 = vpack.c.b16 %v201, %v200
  %v216 = vpack.c.b16 %v203, %v202
  %v217 = vpack.c.b16 %v205, %v204
  %v218 = vpack.c.b16 %v207, %v206
  %v219 = vpack.c.b16 %v209, %v208
  %v220 = vpack.c.b16 %v211, %v210
  %v221 = vpack.c.b16 %v213, %v212
  %230 = vmatprep.subr.bf16.mxu0 0
  %231 = vmatpush1.bf16.msra.mxu0 %v214
  %232 = vmatprep.subr.bf16.mxu0 0
  %233 = vmatpush1.bf16.msra.mxu0 %v215
  %234 = vmatprep.subr.bf16.mxu0 0
  %235 = vmatpush1.bf16.msra.mxu0 %v216
  %236 = vmatprep.subr.bf16.mxu0 0
  %237 = vmatpush1.bf16.msra.mxu0 %v217
  %238 = vmatprep.subr.bf16.mxu0 0
  %239 = vmatpush1.bf16.msra.mxu0 %v218
  %240 = vmatprep.subr.bf16.mxu0 0
  %241 = vmatpush1.bf16.msra.mxu0 %v219
  %242 = vmatprep.subr.bf16.mxu0 0
  %243 = vmatpush1.bf16.msra.mxu0 %v220
  %244 = vmatprep.subr.bf16.mxu0 0
  %245 = vmatpush1.bf16.msra.mxu0 %v221
  %246 = vmatprep.subr.bf16.mxu0 0
  %247 = vmatpush1.bf16.msra.mxu0 0
  %248 = vmatprep.subr.bf16.mxu0 0
  %249 = vmatpush1.bf16.msra.mxu0 0
  %250 = vmatprep.subr.bf16.mxu0 0
  %251 = vmatpush1.bf16.msra.mxu0 0
  %252 = vmatprep.subr.bf16.mxu0 0
  %253 = vmatpush1.bf16.msra.mxu0 0
  %254 = vmatprep.subr.bf16.mxu0 0
  %255 = vmatpush1.bf16.msra.mxu0 0
  %256 = vmatprep.subr.bf16.mxu0 0
  %257 = vmatpush1.bf16.msra.mxu0 0
  %258 = vmatprep.subr.bf16.mxu0 0
  %259 = vmatpush1.bf16.msra.mxu0 0
  %260 = vmatprep.subr.bf16.mxu0 0
  %261 = vmatpush1.bf16.msra.mxu0 0
  %262 = vmatprep.mubr.bf16.mxu0 0
  %263 = vmatmul.mubr.bf16.gmra.mrb[0].mxu0 %v158
  %v264 = vpop.f32.mrb[0].mxu0
  %v265 = vadd.f32 %v180, %v264
  %v266 = vpop.f32.mrb[0].mxu0
  %v267 = vpop.f32.mrb[0].mxu0
  %v268 = vadd.f32 %v180, %v267
  %v269 = vpop.f32.mrb[0].mxu0
  %270 = vdwg.mxu0
  %v271 = vmul.f32 %v265, 0.5
  %v272 = vmul.f32 %v268, 0.5
  %v273 = vmul.f32 %v265, 0.70710677
  %v274 = vmul.f32 %v268, 0.70710677
  %vm275 = vcmp.ge.f32.partialorder %v273, 0.0
  %vm276 = vcmp.ge.f32.partialorder %v274, 0.0
  %v277 = vsel %vm275, 1.0, -1.0
  %v278 = vsel %vm276, 1.0, -1.0
  %v279 = vand.u32 2147483647, %v273
  %v280 = vand.u32 2147483647, %v274
  %v281 = vmul.f32 %v279, 0.3275911
  %v282 = vmul.f32 %v280, 0.3275911
  %v283 = vadd.f32 %v281, 1.0
  %v284 = vadd.f32 %v282, 1.0
  %v285 = vrcp.pop %v283
  %v286 = vmul.f32 1.0, %v285
  %v287 = vrcp.pop %v284
  %v288 = vmul.f32 1.0, %v287
  %v289 = vmul.f32 %v286, 1.0614054
  %v290 = vmul.f32 %v288, 1.0614054
  %v291 = vadd.f32 %v289, -1.4531521
  %v292 = vadd.f32 %v290, -1.4531521
  %v293 = vmul.f32 %v291, %v286
  %v294 = vmul.f32 %v292, %v288
  %v295 = vadd.f32 %v293, 1.4214138
  %v296 = vadd.f32 %v294, 1.4214138
  %v297 = vmul.f32 %v295, %v286
  %v298 = vmul.f32 %v296, %v288
  %v299 = vadd.f32 %v297, -0.28449672
  %v300 = vadd.f32 %v298, -0.28449672
  %v301 = vmul.f32 %v299, %v286
  %v302 = vmul.f32 %v300, %v288
  %v303 = vadd.f32 %v301, 0.2548296
  %v304 = vadd.f32 %v302, 0.2548296
  %v305 = vmul.f32 %v303, %v286
  %v306 = vmul.f32 %v304, %v288
  %v307 = vsub.f32 0.0, %v279
  %v308 = vsub.f32 0.0, %v280
  %v309 = vmul.f32 %v307, %v279
  %v310 = vmul.f32 %v308, %v280
  %v311 = vmul.f32 %v309, 1.442695
  %v312 = vpow.pop %v311
  %v313 = vmul.f32 %v310, 1.442695
  %v314 = vpow.pop %v313
  %v315 = vmul.f32 %v305, %v312
  %v316 = vmul.f32 %v306, %v314
  %v317 = vsub.f32 1.0, %v315
  %v318 = vsub.f32 1.0, %v316
  %v319 = vmul.f32 %v277, %v317
  %v320 = vmul.f32 %v278, %v318
  %v321 = vadd.f32 %v319, 1.0
  %v322 = vadd.f32 %v320, 1.0
  %v323 = vmul.f32 %v271, %v321
  %v324 = vmul.f32 %v272, %v322
  %v325 = vadd.f32 %v323, %v156
  %v326 = vadd.f32 %v324, %v157
  %v327 = vpack.c.bf16 %v326, %v325
  %s328 = scalar_lea.vmem %s4, 64
  %v329 = vld [vmem:[%s328] sm:$0xf]
  %v330 = vld [vmem:[%s328 + $0x4] sm:$0xf]
  %v331 = vld [vmem:[%s328 + $0x8] sm:$0xf]
  %v332 = vld [vmem:[%s328 + $0xc] sm:$0xf]
  %v333 = vld [vmem:[%s328 + $0x10] sm:$0xf]
  %v334 = vld [vmem:[%s328 + $0x14] sm:$0xf]
  %v335 = vld [vmem:[%s328 + $0x18] sm:$0xf]
  %v336 = vld [vmem:[%s328 + $0x1c] sm:$0xf]
  %v337 = vld [vmem:[%s328 + $0x20] sm:$0xf]
  %v338 = vld [vmem:[%s328 + $0x24] sm:$0xf]
  %v339 = vld [vmem:[%s328 + $0x28] sm:$0xf]
  %v340 = vld [vmem:[%s328 + $0x2c] sm:$0xf]
  %v341 = vld [vmem:[%s328 + $0x30] sm:$0xf]
  %v342 = vld [vmem:[%s328 + $0x34] sm:$0xf]
  %v343 = vld [vmem:[%s328 + $0x38] sm:$0xf]
  %v344 = vld [vmem:[%s328 + $0x3c] sm:$0xf]
  %s345 = scalar_lea.vmem %s5, 1
  %v346 = vld [vmem:[%s345] sm:$0x1]
  %v348 = vlaneseq
  %v349 = vshrl.u32 %v348, 7
  %v350 = vsub.s32 0, %v349
  %v351 = vrot.slane %v346, %v350
  %v369 = vunpack.c.l.b16 %v329
  %v370 = vunpack.c.l.b16 %v330
  %v371 = vunpack.c.l.b16 %v331
  %v372 = vunpack.c.l.b16 %v332
  %v373 = vunpack.c.l.b16 %v333
  %v374 = vunpack.c.l.b16 %v334
  %v375 = vunpack.c.l.b16 %v335
  %v376 = vunpack.c.l.b16 %v336
  %v377 = vunpack.c.l.b16 %v337
  %v378 = vunpack.c.l.b16 %v338
  %v379 = vunpack.c.l.b16 %v339
  %v380 = vunpack.c.l.b16 %v340
  %v381 = vunpack.c.l.b16 %v341
  %v382 = vunpack.c.l.b16 %v342
  %v383 = vunpack.c.l.b16 %v343
  %v384 = vunpack.c.l.b16 %v344
  %v385 = vpack.c.b16 %v370, %v369
  %v386 = vpack.c.b16 %v372, %v371
  %v387 = vpack.c.b16 %v374, %v373
  %v388 = vpack.c.b16 %v376, %v375
  %v389 = vpack.c.b16 %v378, %v377
  %v390 = vpack.c.b16 %v380, %v379
  %v391 = vpack.c.b16 %v382, %v381
  %v392 = vpack.c.b16 %v384, %v383
  %401 = vmatprep.subr.bf16.mxu0 0
  %402 = vmatpush1.bf16.msra.mxu0 %v385
  %403 = vmatprep.subr.bf16.mxu0 0
  %404 = vmatpush1.bf16.msra.mxu0 %v386
  %405 = vmatprep.subr.bf16.mxu0 0
  %406 = vmatpush1.bf16.msra.mxu0 %v387
  %407 = vmatprep.subr.bf16.mxu0 0
  %408 = vmatpush1.bf16.msra.mxu0 %v388
  %409 = vmatprep.subr.bf16.mxu0 0
  %410 = vmatpush1.bf16.msra.mxu0 %v389
  %411 = vmatprep.subr.bf16.mxu0 0
  %412 = vmatpush1.bf16.msra.mxu0 %v390
  %413 = vmatprep.subr.bf16.mxu0 0
  %414 = vmatpush1.bf16.msra.mxu0 %v391
  %415 = vmatprep.subr.bf16.mxu0 0
  %416 = vmatpush1.bf16.msra.mxu0 %v392
  %417 = vmatprep.subr.bf16.mxu0 0
  %418 = vmatpush1.bf16.msra.mxu0 0
  %419 = vmatprep.subr.bf16.mxu0 0
  %420 = vmatpush1.bf16.msra.mxu0 0
  %421 = vmatprep.subr.bf16.mxu0 0
  %422 = vmatpush1.bf16.msra.mxu0 0
  %423 = vmatprep.subr.bf16.mxu0 0
  %424 = vmatpush1.bf16.msra.mxu0 0
  %425 = vmatprep.subr.bf16.mxu0 0
  %426 = vmatpush1.bf16.msra.mxu0 0
  %427 = vmatprep.subr.bf16.mxu0 0
  %428 = vmatpush1.bf16.msra.mxu0 0
  %429 = vmatprep.subr.bf16.mxu0 0
  %430 = vmatpush1.bf16.msra.mxu0 0
  %431 = vmatprep.subr.bf16.mxu0 0
  %432 = vmatpush1.bf16.msra.mxu0 0
  %433 = vmatprep.mubr.bf16.mxu0 0
  %434 = vmatmul.mubr.bf16.gmra.mrb[0].mxu0 %v327
  %v435 = vpop.f32.mrb[0].mxu0
  %v436 = vadd.f32 %v351, %v435
  %v437 = vpop.f32.mrb[0].mxu0
  %v438 = vpop.f32.mrb[0].mxu0
  %v439 = vadd.f32 %v351, %v438
  %v440 = vpop.f32.mrb[0].mxu0
  %441 = vdwg.mxu0
  %v442 = vmul.f32 %v436, 0.5
  %v443 = vmul.f32 %v439, 0.5
  %v444 = vmul.f32 %v436, 0.70710677
  %v445 = vmul.f32 %v439, 0.70710677
  %vm446 = vcmp.ge.f32.partialorder %v444, 0.0
  %vm447 = vcmp.ge.f32.partialorder %v445, 0.0
  %v448 = vsel %vm446, 1.0, -1.0
  %v449 = vsel %vm447, 1.0, -1.0
  %v450 = vand.u32 2147483647, %v444
  %v451 = vand.u32 2147483647, %v445
  %v452 = vmul.f32 %v450, 0.3275911
  %v453 = vmul.f32 %v451, 0.3275911
  %v454 = vadd.f32 %v452, 1.0
  %v455 = vadd.f32 %v453, 1.0
  %v456 = vrcp.pop %v454
  %v457 = vmul.f32 1.0, %v456
  %v458 = vrcp.pop %v455
  %v459 = vmul.f32 1.0, %v458
  %v460 = vmul.f32 %v457, 1.0614054
  %v461 = vmul.f32 %v459, 1.0614054
  %v462 = vadd.f32 %v460, -1.4531521
  %v463 = vadd.f32 %v461, -1.4531521
  %v464 = vmul.f32 %v462, %v457
  %v465 = vmul.f32 %v463, %v459
  %v466 = vadd.f32 %v464, 1.4214138
  %v467 = vadd.f32 %v465, 1.4214138
  %v468 = vmul.f32 %v466, %v457
  %v469 = vmul.f32 %v467, %v459
  %v470 = vadd.f32 %v468, -0.28449672
  %v471 = vadd.f32 %v469, -0.28449672
  %v472 = vmul.f32 %v470, %v457
  %v473 = vmul.f32 %v471, %v459
  %v474 = vadd.f32 %v472, 0.2548296
  %v475 = vadd.f32 %v473, 0.2548296
  %v476 = vmul.f32 %v474, %v457
  %v477 = vmul.f32 %v475, %v459
  %v478 = vsub.f32 0.0, %v450
  %v479 = vsub.f32 0.0, %v451
  %v480 = vmul.f32 %v478, %v450
  %v481 = vmul.f32 %v479, %v451
  %v482 = vmul.f32 %v480, 1.442695
  %v483 = vpow.pop %v482
  %v484 = vmul.f32 %v481, 1.442695
  %v485 = vpow.pop %v484
  %v486 = vmul.f32 %v476, %v483
  %v487 = vmul.f32 %v477, %v485
  %v488 = vsub.f32 1.0, %v486
  %v489 = vsub.f32 1.0, %v487
  %v490 = vmul.f32 %v448, %v488
  %v491 = vmul.f32 %v449, %v489
  %v492 = vadd.f32 %v490, 1.0
  %v493 = vadd.f32 %v491, 1.0
  %v494 = vmul.f32 %v442, %v492
  %v495 = vmul.f32 %v443, %v493
  %v496 = vadd.f32 %v494, %v156
  %v497 = vadd.f32 %v495, %v157
  %v498 = vpack.c.bf16 %v497, %v496
  %s499 = scalar_lea.vmem %s4, 128
  %v500 = vld [vmem:[%s499] sm:$0xf]
  %v501 = vld [vmem:[%s499 + $0x4] sm:$0xf]
  %v502 = vld [vmem:[%s499 + $0x8] sm:$0xf]
  %v503 = vld [vmem:[%s499 + $0xc] sm:$0xf]
  %v504 = vld [vmem:[%s499 + $0x10] sm:$0xf]
  %v505 = vld [vmem:[%s499 + $0x14] sm:$0xf]
  %v506 = vld [vmem:[%s499 + $0x18] sm:$0xf]
  %v507 = vld [vmem:[%s499 + $0x1c] sm:$0xf]
  %v508 = vld [vmem:[%s499 + $0x20] sm:$0xf]
  %v509 = vld [vmem:[%s499 + $0x24] sm:$0xf]
  %v510 = vld [vmem:[%s499 + $0x28] sm:$0xf]
  %v511 = vld [vmem:[%s499 + $0x2c] sm:$0xf]
  %v512 = vld [vmem:[%s499 + $0x30] sm:$0xf]
  %v513 = vld [vmem:[%s499 + $0x34] sm:$0xf]
  %v514 = vld [vmem:[%s499 + $0x38] sm:$0xf]
  %v515 = vld [vmem:[%s499 + $0x3c] sm:$0xf]
  %s516 = scalar_lea.vmem %s5, 2
  %v517 = vld [vmem:[%s516] sm:$0x1]
  %v519 = vlaneseq
  %v520 = vshrl.u32 %v519, 7
  %v521 = vsub.s32 0, %v520
  %v522 = vrot.slane %v517, %v521
  %v540 = vunpack.c.l.b16 %v500
  %v541 = vunpack.c.l.b16 %v501
  %v542 = vunpack.c.l.b16 %v502
  %v543 = vunpack.c.l.b16 %v503
  %v544 = vunpack.c.l.b16 %v504
  %v545 = vunpack.c.l.b16 %v505
  %v546 = vunpack.c.l.b16 %v506
  %v547 = vunpack.c.l.b16 %v507
  %v548 = vunpack.c.l.b16 %v508
  %v549 = vunpack.c.l.b16 %v509
  %v550 = vunpack.c.l.b16 %v510
  %v551 = vunpack.c.l.b16 %v511
  %v552 = vunpack.c.l.b16 %v512
  %v553 = vunpack.c.l.b16 %v513
  %v554 = vunpack.c.l.b16 %v514
  %v555 = vunpack.c.l.b16 %v515
  %v556 = vpack.c.b16 %v541, %v540
  %v557 = vpack.c.b16 %v543, %v542
  %v558 = vpack.c.b16 %v545, %v544
  %v559 = vpack.c.b16 %v547, %v546
  %v560 = vpack.c.b16 %v549, %v548
  %v561 = vpack.c.b16 %v551, %v550
  %v562 = vpack.c.b16 %v553, %v552
  %v563 = vpack.c.b16 %v555, %v554
  %572 = vmatprep.subr.bf16.mxu0 0
  %573 = vmatpush1.bf16.msra.mxu0 %v556
  %574 = vmatprep.subr.bf16.mxu0 0
  %575 = vmatpush1.bf16.msra.mxu0 %v557
  %576 = vmatprep.subr.bf16.mxu0 0
  %577 = vmatpush1.bf16.msra.mxu0 %v558
  %578 = vmatprep.subr.bf16.mxu0 0
  %579 = vmatpush1.bf16.msra.mxu0 %v559
  %580 = vmatprep.subr.bf16.mxu0 0
  %581 = vmatpush1.bf16.msra.mxu0 %v560
  %582 = vmatprep.subr.bf16.mxu0 0
  %583 = vmatpush1.bf16.msra.mxu0 %v561
  %584 = vmatprep.subr.bf16.mxu0 0
  %585 = vmatpush1.bf16.msra.mxu0 %v562
  %586 = vmatprep.subr.bf16.mxu0 0
  %587 = vmatpush1.bf16.msra.mxu0 %v563
  %588 = vmatprep.subr.bf16.mxu0 0
  %589 = vmatpush1.bf16.msra.mxu0 0
  %590 = vmatprep.subr.bf16.mxu0 0
  %591 = vmatpush1.bf16.msra.mxu0 0
  %592 = vmatprep.subr.bf16.mxu0 0
  %593 = vmatpush1.bf16.msra.mxu0 0
  %594 = vmatprep.subr.bf16.mxu0 0
  %595 = vmatpush1.bf16.msra.mxu0 0
  %596 = vmatprep.subr.bf16.mxu0 0
  %597 = vmatpush1.bf16.msra.mxu0 0
  %598 = vmatprep.subr.bf16.mxu0 0
  %599 = vmatpush1.bf16.msra.mxu0 0
  %600 = vmatprep.subr.bf16.mxu0 0
  %601 = vmatpush1.bf16.msra.mxu0 0
  %602 = vmatprep.subr.bf16.mxu0 0
  %603 = vmatpush1.bf16.msra.mxu0 0
  %604 = vmatprep.mubr.bf16.mxu0 0
  %605 = vmatmul.mubr.bf16.gmra.mrb[0].mxu0 %v498
  %v606 = vpop.f32.mrb[0].mxu0
  %v607 = vadd.f32 %v522, %v606
  %v608 = vpop.f32.mrb[0].mxu0
  %v609 = vpop.f32.mrb[0].mxu0
  %v610 = vadd.f32 %v522, %v609
  %v611 = vpop.f32.mrb[0].mxu0
  %612 = vdwg.mxu0
  %v613 = vmul.f32 %v607, 0.5
  %v614 = vmul.f32 %v610, 0.5
  %v615 = vmul.f32 %v607, 0.70710677
  %v616 = vmul.f32 %v610, 0.70710677
  %vm617 = vcmp.ge.f32.partialorder %v615, 0.0
  %vm618 = vcmp.ge.f32.partialorder %v616, 0.0
  %v619 = vsel %vm617, 1.0, -1.0
  %v620 = vsel %vm618, 1.0, -1.0
  %v621 = vand.u32 2147483647, %v615
  %v622 = vand.u32 2147483647, %v616
  %v623 = vmul.f32 %v621, 0.3275911
  %v624 = vmul.f32 %v622, 0.3275911
  %v625 = vadd.f32 %v623, 1.0
  %v626 = vadd.f32 %v624, 1.0
  %v627 = vrcp.pop %v625
  %v628 = vmul.f32 1.0, %v627
  %v629 = vrcp.pop %v626
  %v630 = vmul.f32 1.0, %v629
  %v631 = vmul.f32 %v628, 1.0614054
  %v632 = vmul.f32 %v630, 1.0614054
  %v633 = vadd.f32 %v631, -1.4531521
  %v634 = vadd.f32 %v632, -1.4531521
  %v635 = vmul.f32 %v633, %v628
  %v636 = vmul.f32 %v634, %v630
  %v637 = vadd.f32 %v635, 1.4214138
  %v638 = vadd.f32 %v636, 1.4214138
  %v639 = vmul.f32 %v637, %v628
  %v640 = vmul.f32 %v638, %v630
  %v641 = vadd.f32 %v639, -0.28449672
  %v642 = vadd.f32 %v640, -0.28449672
  %v643 = vmul.f32 %v641, %v628
  %v644 = vmul.f32 %v642, %v630
  %v645 = vadd.f32 %v643, 0.2548296
  %v646 = vadd.f32 %v644, 0.2548296
  %v647 = vmul.f32 %v645, %v628
  %v648 = vmul.f32 %v646, %v630
  %v649 = vsub.f32 0.0, %v621
  %v650 = vsub.f32 0.0, %v622
  %v651 = vmul.f32 %v649, %v621
  %v652 = vmul.f32 %v650, %v622
  %v653 = vmul.f32 %v651, 1.442695
  %v654 = vpow.pop %v653
  %v655 = vmul.f32 %v652, 1.442695
  %v656 = vpow.pop %v655
  %v657 = vmul.f32 %v647, %v654
  %v658 = vmul.f32 %v648, %v656
  %v659 = vsub.f32 1.0, %v657
  %v660 = vsub.f32 1.0, %v658
  %v661 = vmul.f32 %v619, %v659
  %v662 = vmul.f32 %v620, %v660
  %v663 = vadd.f32 %v661, 1.0
  %v664 = vadd.f32 %v662, 1.0
  %v665 = vmul.f32 %v613, %v663
  %v666 = vmul.f32 %v614, %v664
  %v667 = vadd.f32 %v665, %v156
  %v668 = vadd.f32 %v666, %v157
  %v669 = vpack.c.bf16 %v668, %v667
  %v670 = vld [vmem:[%s6] sm:$0xf]
  %v671 = vld [vmem:[%s6 + $0x4] sm:$0xf]
  %v672 = vld [vmem:[%s6 + $0x8] sm:$0xf]
  %v673 = vld [vmem:[%s6 + $0xc] sm:$0xf]
  %v674 = vld [vmem:[%s6 + $0x10] sm:$0xf]
  %v675 = vld [vmem:[%s6 + $0x14] sm:$0xf]
  %v676 = vld [vmem:[%s6 + $0x18] sm:$0xf]
  %v677 = vld [vmem:[%s6 + $0x1c] sm:$0xf]
  %v678 = vld [vmem:[%s6 + $0x20] sm:$0xf]
  %v679 = vld [vmem:[%s6 + $0x24] sm:$0xf]
  %v680 = vld [vmem:[%s6 + $0x28] sm:$0xf]
  %v681 = vld [vmem:[%s6 + $0x2c] sm:$0xf]
  %v682 = vld [vmem:[%s6 + $0x30] sm:$0xf]
  %v683 = vld [vmem:[%s6 + $0x34] sm:$0xf]
  %v684 = vld [vmem:[%s6 + $0x38] sm:$0xf]
  %v685 = vld [vmem:[%s6 + $0x3c] sm:$0xf]
  %v686 = vld [vmem:[%s7] sm:$0x1]
  %v688 = vlaneseq
  %v689 = vshrl.u32 %v688, 7
  %v690 = vsub.s32 0, %v689
  %v691 = vrot.slane %v686, %v690
  %v709 = vunpack.c.l.b16 %v670
  %v710 = vunpack.c.l.b16 %v671
  %v711 = vunpack.c.l.b16 %v672
  %v712 = vunpack.c.l.b16 %v673
  %v713 = vunpack.c.l.b16 %v674
  %v714 = vunpack.c.l.b16 %v675
  %v715 = vunpack.c.l.b16 %v676
  %v716 = vunpack.c.l.b16 %v677
  %v717 = vunpack.c.l.b16 %v678
  %v718 = vunpack.c.l.b16 %v679
  %v719 = vunpack.c.l.b16 %v680
  %v720 = vunpack.c.l.b16 %v681
  %v721 = vunpack.c.l.b16 %v682
  %v722 = vunpack.c.l.b16 %v683
  %v723 = vunpack.c.l.b16 %v684
  %v724 = vunpack.c.l.b16 %v685
  %v725 = vpack.c.b16 %v710, %v709
  %v726 = vpack.c.b16 %v712, %v711
  %v727 = vpack.c.b16 %v714, %v713
  %v728 = vpack.c.b16 %v716, %v715
  %v729 = vpack.c.b16 %v718, %v717
  %v730 = vpack.c.b16 %v720, %v719
  %v731 = vpack.c.b16 %v722, %v721
  %v732 = vpack.c.b16 %v724, %v723
  %741 = vmatprep.subr.bf16.mxu0 0
  %742 = vmatpush1.bf16.msra.mxu0 %v725
  %743 = vmatprep.subr.bf16.mxu0 0
  %744 = vmatpush1.bf16.msra.mxu0 %v726
  %745 = vmatprep.subr.bf16.mxu0 0
  %746 = vmatpush1.bf16.msra.mxu0 %v727
  %747 = vmatprep.subr.bf16.mxu0 0
  %748 = vmatpush1.bf16.msra.mxu0 %v728
  %749 = vmatprep.subr.bf16.mxu0 0
  %750 = vmatpush1.bf16.msra.mxu0 %v729
  %751 = vmatprep.subr.bf16.mxu0 0
  %752 = vmatpush1.bf16.msra.mxu0 %v730
  %753 = vmatprep.subr.bf16.mxu0 0
  %754 = vmatpush1.bf16.msra.mxu0 %v731
  %755 = vmatprep.subr.bf16.mxu0 0
  %756 = vmatpush1.bf16.msra.mxu0 %v732
  %757 = vmatprep.subr.bf16.mxu0 0
  %758 = vmatpush1.bf16.msra.mxu0 0
  %759 = vmatprep.subr.bf16.mxu0 0
  %760 = vmatpush1.bf16.msra.mxu0 0
  %761 = vmatprep.subr.bf16.mxu0 0
  %762 = vmatpush1.bf16.msra.mxu0 0
  %763 = vmatprep.subr.bf16.mxu0 0
  %764 = vmatpush1.bf16.msra.mxu0 0
  %765 = vmatprep.subr.bf16.mxu0 0
  %766 = vmatpush1.bf16.msra.mxu0 0
  %767 = vmatprep.subr.bf16.mxu0 0
  %768 = vmatpush1.bf16.msra.mxu0 0
  %769 = vmatprep.subr.bf16.mxu0 0
  %770 = vmatpush1.bf16.msra.mxu0 0
  %771 = vmatprep.subr.bf16.mxu0 0
  %772 = vmatpush1.bf16.msra.mxu0 0
  %773 = vmatprep.mubr.bf16.mxu0 0
  %774 = vmatmul.mubr.bf16.gmra.mrb[0].mxu0 %v669
  %v775 = vpop.f32.mrb[0].mxu0
  %v776 = vadd.f32 %v691, %v775
  %v777 = vpop.f32.mrb[0].mxu0
  %v778 = vpop.f32.mrb[0].mxu0
  %v779 = vadd.f32 %v691, %v778
  %v780 = vpop.f32.mrb[0].mxu0
  %781 = vdwg.mxu0
  %vm782 = vcmask 31744
  %783 = vst.msk [vmem:[%s8] sm:$0xff] %vm782, %v776
  %784 = vst.msk [vmem:[%s8 + $0x8] sm:$0xff] %vm782, %v779
  // Predicated region
  $region34: #{scorenet_forward.1} parent=0 // pred_check
    _
  $region35: #{scorenet_forward.1} parent=0 // pred_check_branch
    %786 = sbr.rel (0) target = $region37
  $region36: #{scorenet_forward.1} parent=0 // pred_region
    _
  $region37: #{scorenet_forward.1} parent=0 // pred_fallthru
    _
  // Predicated region
  $region38: #{scorenet_forward.1} parent=0 // pred_check
    _
  $region39: #{scorenet_forward.1} parent=0 // pred_check_branch
    %788 = sbr.rel (0) target = $region41
  $region40: #{scorenet_forward.1} parent=0 // pred_region
    _
  $region41: #{scorenet_forward.1} parent=0 // pred_fallthru
    _

</llo_original>
